<compile_context>
chip_gen: v7x
topology: tpu7x:2x2x1
jax: 0.10.0
libtpu: 0.0.40
codegen_flags: <defaults>
</compile_context>

<pallas_src>
from functools import partial

import jax
import jax.numpy as jnp
from jax.experimental import pallas as pl
from jax.experimental.pallas import tpu as pltpu


def gcn_kernel(x_ref, w1f_ref, b1_ref, w2bd_ref, o_ref):
    # x_ref:    (GS, LN)  G lane-slabs stacked on sublanes; each slab is tb
    #                     batches concatenated along lanes (bf16 or f32)
    # w1f_ref:  (LN, LN)  blockdiag_tb(W1^T) + I   (residual folded in)
    # b1_ref:   (1, LN)   conv1 bias tiled tb times (f32)
    # w2bd_ref: (GS, GS)  blockdiag_G(W2)
    # o_ref:    (GS, LN)
    # conv1 + residual (folded): f32 accumulation on the MXU.
    h = jnp.dot(x_ref[...], w1f_ref[...], preferred_element_type=jnp.float32)
    # bias + relu in f32 on the VPU.
    h = jnp.maximum(h + b1_ref[...], 0.0)
    # conv2 (state mixing, bias-free), again f32 accumulation.
    out = jnp.dot(w2bd_ref[...], h.astype(w2bd_ref.dtype),
                  preferred_element_type=jnp.float32)
    o_ref[...] = out.astype(o_ref.dtype)


def _largest_divisor_leq(n, cap):
    cap = max(1, min(n, cap))
    for d in range(cap, 0, -1):
        if n % d == 0:
            return d
    return 1


def _pick_tiling(batch, num_state, num_node, *, lane_target=128, row_target=256,
                 min_grid=2):
    """tb: batches packed along lanes (tb*N ~ lane_target).
       g : lane-slabs packed along sublanes per grid step (g*S ~ row_target).
       Keeps grid = batch/(tb*g) >= min_grid when the batch allows it."""
    tb_cap = max(1, lane_target // max(num_node, 1))
    if batch >= min_grid:
        tb_cap = min(tb_cap, batch // min_grid)
    tb = _largest_divisor_leq(batch, tb_cap)
    nb = batch // tb
    g_cap = max(1, row_target // max(num_state, 1))
    if nb >= min_grid:
        g_cap = min(g_cap, nb // min_grid)
    g = _largest_divisor_leq(nb, g_cap)
    return tb, g


@partial(jax.jit, static_argnames=("tb", "g", "mxu_dtype", "lane_target"))
def gcn_forward(x, w1, b1, w2, *, tb=None, g=None, mxu_dtype=jnp.bfloat16,
                lane_target=128):
    """x: (B, S, N), w1: (N, N), b1: (N,), w2: (S, S).

    mxu_dtype: dtype of the MXU operands (default bf16: ~2-4x MXU throughput and
               half the weight/activation DMA; accumulation stays f32).
               Pass None for the exact f32 path.
    """
    B, S, N = x.shape
    tb_auto, g_auto = _pick_tiling(B, S, N, lane_target=lane_target)
    tb = tb_auto if tb is None else tb
    g = g_auto if g is None else g
    assert B % tb == 0, "tb must divide the batch size"
    nb = B // tb
    assert nb % g == 0, "g must divide B // tb"
    ng = nb // g
    ln = tb * N          # lane width per block
    gs = g * S           # sublane rows per block

    wdt = x.dtype if mxu_dtype is None else jnp.dtype(mxu_dtype)

    # conv1 operator: block-diag of tb copies of W1^T with the residual folded
    # in as "+ I" (built once per call; precompute outside in a real model).
    w1f = (jnp.kron(jnp.eye(tb, dtype=w1.dtype), w1.T)
           + jnp.eye(ln, dtype=w1.dtype)).astype(wdt)
    b1t = jnp.tile(b1.astype(jnp.float32), tb).reshape(1, ln)     # stays f32
    # conv2 operator: block-diag of g copies of W2.
    w2bd = jnp.kron(jnp.eye(g, dtype=w2.dtype), w2).astype(wdt)

    # Layout plumbing (no-op when tb == 1): tb batches side-by-side on lanes,
    # then G slabs grouped per grid step along sublanes (free row-major reshape).
    x_in = x.astype(wdt)
    x_cat = x_in.reshape(nb, tb, S, N).transpose(0, 2, 1, 3).reshape(nb, S, ln)
    x_blk = x_cat.reshape(ng, gs, ln)

    # Production-N knobs: single-buffer the big replicated weights and raise the
    # scoped VMEM limit.  Left at defaults when the weights are small.
    big_weights = (w1f.size + w2bd.size) * jnp.dtype(wdt).itemsize > (8 << 20)
    wkw = {"pipeline_mode": pl.Buffered(1)} if big_weights else {}
    vmem_limit = (64 << 20) if big_weights else None

    out_blk = pl.pallas_call(
        gcn_kernel,
        out_shape=jax.ShapeDtypeStruct((ng, gs, ln), x.dtype),
        grid=(ng,),
        in_specs=[
            pl.BlockSpec((None, gs, ln), lambda i: (i, 0, 0)),   # x block per step
            pl.BlockSpec((ln, ln), lambda i: (0, 0), **wkw),     # blockdiag(W1^T)+I
            pl.BlockSpec((1, ln), lambda i: (0, 0)),             # b1 (tiled), f32
            pl.BlockSpec((gs, gs), lambda i: (0, 0), **wkw),     # blockdiag(W2)
        ],
        out_specs=pl.BlockSpec((None, gs, ln), lambda i: (i, 0, 0)),
        compiler_params=pltpu.CompilerParams(
            dimension_semantics=("parallel",),
            vmem_limit_bytes=vmem_limit),
    )(x_blk, w1f, b1t, w2bd)

    # Undo the layout plumbing: (ng, G*S, tb*N) -> (B, S, N)
    return (out_blk.reshape(nb, S, tb, N)
            .transpose(0, 2, 1, 3)
            .reshape(B, S, N))


def gcn_reference(x, w1, b1, w2):
    # Pure-JAX reference mirroring the PyTorch forward exactly (f32).
    h = jnp.einsum("bsm,nm->bsn", x, w1) + b1[None, None, :]
    h = h + x
    h = jnp.maximum(h, 0.0)
    return jnp.einsum("ts,bsn->btn", w2, h)


if __name__ == "__main__":
    # Small shapes consistent with the module; B chosen so the kernel exercises
    # both packing axes: tb=8 batches on lanes (ln=128), G=4 slabs on sublanes
    # (gs=128), grid=2 (one step per v7x TensorCore).
    B, num_state, num_node = 64, 32, 16

    key = jax.random.PRNGKey(0)
    kx, kw1, kb1, kw2 = jax.random.split(key, 4)

    x  = jax.random.normal(kx,  (B, num_state, num_node), dtype=jnp.float32)
    w1 = jax.random.normal(kw1, (num_node, num_node),     dtype=jnp.float32) * 0.1
    b1 = jax.random.normal(kb1, (num_node,),              dtype=jnp.float32) * 0.1
    w2 = jax.random.normal(kw2, (num_state, num_state),   dtype=jnp.float32) * 0.1

    ref = gcn_reference(x, w1, b1, w2)

    # Default fast path: bf16 MXU operands / bf16 activation stream, f32 accum.
    out_bf16 = jax.block_until_ready(gcn_forward(x, w1, b1, w2))
    assert out_bf16.shape == (B, num_state, num_node)
    assert out_bf16.dtype == x.dtype
    assert jnp.allclose(out_bf16, ref, atol=1e-1, rtol=1e-1), "bf16 path mismatch"

    # Exact f32 path (validates the block-diag / packing structure tightly).
    out_f32 = jax.block_until_ready(gcn_forward(x, w1, b1, w2, mxu_dtype=None))
    assert jnp.allclose(out_f32, ref, atol=1e-4, rtol=1e-4), "f32 path mismatch"

    print("KERNEL_OK")
</pallas_src>

<mosaic_0001>
module attributes {stable_mosaic.version = 11 : i64} {
  func.func @gcn_kernel(%arg0: i32, %arg1: memref<1x128x128xbf16, #tpu.memory_space<vmem>>, %arg2: memref<128x128xbf16, #tpu.memory_space<vmem>>, %arg3: memref<1x128xf32, #tpu.memory_space<vmem>>, %arg4: memref<128x128xbf16, #tpu.memory_space<vmem>>, %arg5: memref<1x128x128xf32, #tpu.memory_space<vmem>>) attributes {dimension_semantics = [#tpu.dimension_semantics<parallel>], iteration_bounds = array<i64: 2>, scalar_prefetch = 0 : i64, scratch_operands = 0 : i64, tpu.core_type = #tpu.core_type<tc>, window_params = [{transform_indices = @transform_0, window_bounds = array<i64: 1, 128, 128>}, {pipeline_mode = #tpu.pipeline_mode<synchronous>, transform_indices = @transform_1, window_bounds = array<i64: 128, 128>}, {pipeline_mode = #tpu.pipeline_mode<synchronous>, transform_indices = @transform_2, window_bounds = array<i64: 1, 128>}, {pipeline_mode = #tpu.pipeline_mode<synchronous>, transform_indices = @transform_3, window_bounds = array<i64: 128, 128>}, {transform_indices = @transform_4, window_bounds = array<i64: 1, 128, 128>}]} {
    %c0 = arith.constant 0 : index
    %c0_0 = arith.constant 0 : index
    %c0_1 = arith.constant 0 : index
    %0 = vector.load %arg1[%c0, %c0_0, %c0_1] : memref<1x128x128xbf16, #tpu.memory_space<vmem>>, vector<1x128x128xbf16>
    %1 = vector.shape_cast %0 : vector<1x128x128xbf16> to vector<128x128xbf16>
    %c0_2 = arith.constant 0 : index
    %c0_3 = arith.constant 0 : index
    %2 = vector.load %arg2[%c0_2, %c0_3] : memref<128x128xbf16, #tpu.memory_space<vmem>>, vector<128x128xbf16>
    %cst = arith.constant dense<0.000000e+00> : vector<128x128xf32>
    %3 = tpu.matmul %1, %2, %cst {dimension_numbers = #tpu.dot_dimension_numbers<[1], [0], [0], [1], [0, 0, 1, 1], [], []>} : vector<128x128xbf16>, vector<128x128xbf16>, vector<128x128xf32> -> vector<128x128xf32>
    %c0_4 = arith.constant 0 : index
    %c0_5 = arith.constant 0 : index
    %4 = vector.load %arg3[%c0_4, %c0_5] : memref<1x128xf32, #tpu.memory_space<vmem>>, vector<1x128xf32>
    %5 = vector.broadcast %4 : vector<1x128xf32> to vector<128x128xf32>
    %6 = arith.addf %3, %5 : vector<128x128xf32>
    %cst_6 = arith.constant 0.000000e+00 : f32
    %7 = vector.broadcast %cst_6 : f32 to vector<128x128xf32>
    %8 = arith.maximumf %6, %7 : vector<128x128xf32>
    %c0_7 = arith.constant 0 : index
    %c0_8 = arith.constant 0 : index
    %9 = vector.load %arg4[%c0_7, %c0_8] : memref<128x128xbf16, #tpu.memory_space<vmem>>, vector<128x128xbf16>
    %10 = arith.truncf %8 : vector<128x128xf32> to vector<128x128xbf16>
    %cst_9 = arith.constant dense<0.000000e+00> : vector<128x128xf32>
    %11 = tpu.matmul %9, %10, %cst_9 {dimension_numbers = #tpu.dot_dimension_numbers<[1], [0], [0], [1], [0, 0, 1, 1], [], []>} : vector<128x128xbf16>, vector<128x128xbf16>, vector<128x128xf32> -> vector<128x128xf32>
    %c0_10 = arith.constant 0 : index
    %c0_11 = arith.constant 0 : index
    %c0_12 = arith.constant 0 : index
    %12 = vector.load %arg5[%c0_10, %c0_11, %c0_12] : memref<1x128x128xf32, #tpu.memory_space<vmem>>, vector<1x128x128xf32>
    %13 = vector.shape_cast %12 : vector<1x128x128xf32> to vector<128x128xf32>
    %14 = vector.shape_cast %11 : vector<128x128xf32> to vector<1x128x128xf32>
    tpu.vector_store %arg5[%c0_10, %c0_11, %c0_12], %14 {strides = array<i32>} : memref<1x128x128xf32, #tpu.memory_space<vmem>>, vector<1x128x128xf32>,
    return
  }
  func.func @transform_0(%arg0: i32) -> (i32, i32, i32) {
    %c0_i32 = arith.constant 0 : i32
    %c0_i32_0 = arith.constant 0 : i32
    %c0_i32_1 = arith.constant 0 : i32
    return %arg0, %c0_i32, %c0_i32_0 : i32, i32, i32
  }
  func.func @transform_1(%arg0: i32) -> (i32, i32) {
    %c0_i32 = arith.constant 0 : i32
    %c0_i32_0 = arith.constant 0 : i32
    %c0_i32_1 = arith.constant 0 : i32
    return %c0_i32, %c0_i32_0 : i32, i32
  }
  func.func @transform_2(%arg0: i32) -> (i32, i32) {
    %c0_i32 = arith.constant 0 : i32
    %c0_i32_0 = arith.constant 0 : i32
    %c0_i32_1 = arith.constant 0 : i32
    return %c0_i32, %c0_i32_0 : i32, i32
  }
  func.func @transform_3(%arg0: i32) -> (i32, i32) {
    %c0_i32 = arith.constant 0 : i32
    %c0_i32_0 = arith.constant 0 : i32
    %c0_i32_1 = arith.constant 0 : i32
    return %c0_i32, %c0_i32_0 : i32, i32
  }
  func.func @transform_4(%arg0: i32) -> (i32, i32, i32) {
    %c0_i32 = arith.constant 0 : i32
    %c0_i32_0 = arith.constant 0 : i32
    %c0_i32_1 = arith.constant 0 : i32
    return %arg0, %c0_i32, %c0_i32_0 : i32, i32, i32
  }
}

</mosaic_0001>

<llo_original>
// kernel: tile.8
$region0: #{tile.8}
  #allocation0 [shape = 's32[1]{0}', space=sflag, size = 0x4, scoped, tag = 'scoped memory for tile.8']
  %s0 = inlined_call_operand.vmem [shape: f32[16], index: 0, kind: input, shape index: {}]
  %s1 = inlined_call_operand.vmem [shape: f32[8,16], index: 1, kind: output, shape index: {}]
  // Predicated region
  $region2: #{tile.8} parent=0 // pred_check
    _
  $region3: #{tile.8} parent=0 // pred_check_branch
    %3 = sbr.rel (0) target = $region5
  $region4: #{tile.8} parent=0 // pred_region
    _
  $region5: #{tile.8} parent=0 // pred_fallthru
    _
  %v4 = vld [vmem:[%s0] ss:$0 sm:$0xff]
  %5 = vst [vmem:[%s1] sm:$0xff] %v4

// kernel: tile.9
$region0: #{tile.9}
  %s0 = inlined_call_operand.vmem [shape: f32[8,16], index: 0, kind: input, shape index: {}]
  %s1 = inlined_call_operand.vmem [shape: f32[1,128], index: 1, kind: output, shape index: {}]
  $region1: #{tile.9} parent=0
    #allocation0 [shape = 'u8[4096]{0}', space=vmem, size = 0x1000, scoped, tag = 'scoped mem for output reshape']
    %v2 = vld [vmem:[%s0] sm:$0x1]
    %vm3 = vcmask 130048
    %4 = vst.msk [vmem:[#allocation0] sm:$0x1] %vm3, %v2
    %s5 = scalar_lea.vmem %s0, 7
    %v6 = vld [vmem:[%s5] sm:$0x1]
    %7 = vrot.lane.b32.xlu0 %v6, 112
    %v8 = vpop.permute.xlu0 %7
    %vm9 = vcmask 1048448
    %10 = vst.msk [vmem:[#allocation0] sm:$0x1] %vm9, %v8
    %s11 = scalar_lea.vmem %s0, 6
    %v12 = vld [vmem:[%s11] sm:$0x1]
    %13 = vrot.lane.b32.xlu0 %v12, 96
    %v14 = vpop.permute.xlu0 %13
    %vm15 = vcmask 917248
    %16 = vst.msk [vmem:[#allocation0] sm:$0x1] %vm15, %v14
    %s17 = scalar_lea.vmem %s0, 5
    %v18 = vld [vmem:[%s17] sm:$0x1]
    %19 = vrot.lane.b32.xlu0 %v18, 80
    %v20 = vpop.permute.xlu0 %19
    %vm21 = vcmask 786048
    %22 = vst.msk [vmem:[#allocation0] sm:$0x1] %vm21, %v20
    %s23 = scalar_lea.vmem %s0, 4
    %v24 = vld [vmem:[%s23] sm:$0x1]
    %25 = vrot.lane.b32.xlu0 %v24, 64
    %v26 = vpop.permute.xlu0 %25
    %vm27 = vcmask 654848
    %28 = vst.msk [vmem:[#allocation0] sm:$0x1] %vm27, %v26
    %s29 = scalar_lea.vmem %s0, 3
    %v30 = vld [vmem:[%s29] sm:$0x1]
    %31 = vrot.lane.b32.xlu0 %v30, 48
    %v32 = vpop.permute.xlu0 %31
    %vm33 = vcmask 523648
    %34 = vst.msk [vmem:[#allocation0] sm:$0x1] %vm33, %v32
    %s35 = scalar_lea.vmem %s0, 2
    %v36 = vld [vmem:[%s35] sm:$0x1]
    %37 = vrot.lane.b32.xlu0 %v36, 32
    %v38 = vpop.permute.xlu0 %37
    %vm39 = vcmask 392448
    %40 = vst.msk [vmem:[#allocation0] sm:$0x1] %vm39, %v38
    %s41 = scalar_lea.vmem %s0, 1
    %v42 = vld [vmem:[%s41] sm:$0x1]
    %43 = vrot.lane.b32.xlu0 %v42, 16
    %v44 = vpop.permute.xlu0 %43
    %vm45 = vcmask 261248
    %46 = vst.msk [vmem:[#allocation0] sm:$0x1] %vm45, %v44
    %s48 = sshllo.u32 0, 1
    %v50 = vld [vmem:[#allocation0] sm:%s48]
    %s51 = sshllo.u32 0, 1
    %52 = vst [vmem:[%s1] sm:%s51] %v50

// kernel: gcn_forward.1
$region0: #{gcn_forward.1}
  #allocation0 [shape = 'u32[]', space=smem, size = 0x4, offset = 0x4, fixed_abs, tag = 'smem constant byte address 0x4 - core index']
  #allocation1 [shape = 'u32[144,128]{1,0:T(1,128)}', space=vmem, size = 0x12000, scoped, tag = 'internal scratch']
  %s0 = inlined_call_operand.vmem [shape: bf16[2,128,128], index: 0, kind: input, shape index: {}]
  %s1 = inlined_call_operand.vmem [shape: bf16[128,128], index: 1, kind: input, shape index: {}]
  %s2 = inlined_call_operand.vmem [shape: f32[1,128], index: 2, kind: input, shape index: {}]
  %s3 = inlined_call_operand.vmem [shape: bf16[128,128], index: 3, kind: input, shape index: {}]
  %s4 = inlined_call_operand.vmem [shape: f32[2,128,128], index: 4, kind: output, shape index: {}]
  %s5 = sld [smem:[#allocation0]]
  $region49: #{gcn_forward.1} parent=0
    _
  %s7 = ssub.s32 1, %s5
  %s8 = scalar_select 0, %s7, %s5
  loop: start=0, step=1, limit=4
  $region2: #{gcn_forward.1} parent=0 // loop_pre_header
    _
  $region3: #{gcn_forward.1} parent=0 // loop_header
    %s10 = sphi 0, %s14
    %p11 = scmp.ge.s32.totalorder %s10, 4
    %s20 = sphi 0, %s22
    %s23 = sphi 0, %s20
    %s24 = sphi 0, %s23
    %s40 = sphi 0, %s24
    %s44 = sphi 0, %s44
    %s46 = sphi 0, %s44
    %s47 = sphi 0, %s46
    %s61 = sphi 0, %s47
    %s65 = sphi 0, %s65
    %s67 = sphi 0, %s65
    %s68 = sphi 0, %s67
    %s82 = sphi 0, %s68
    %s86 = sphi 0, %s86
    %s88 = sphi 0, %s86
    %s89 = sphi 0, %s88
    %s103 = sphi 0, %s89
    %s109 = sphi 0, %s111
    %s112 = sphi 0, %s109
    %s113 = sphi 0, %s112
    %s129 = sphi 0, %s113
  $region4: #{gcn_forward.1} parent=0 // loop_header_branch
    %13 = sbr.rel (%p11) target = $region8
  $region5: #{gcn_forward.1} parent=0 // loop_body
    %s15 = ssub.s32 %s10, 1
    %s16 = ssub.s32 %s10, 2
    %s17 = sadd.s32 %s10, 1
    %s18 = ssub.s32 %s10, %s17
    %p19 = scmp.eq.s32.totalorder %s18, 0
    %s21 = sadd.s32 %s20, 1
    %s22 = scalar_select %p19, %s20, %s21
    %p25 = pneg %p19
    %p26 = scmp.eq.s32.totalorder %s10, 1
    %p27 = por %p25, %p26
    %p28 = scmp.ne.s32.totalorder %s20, %s23
    %p29 = scmp.eq.s32.totalorder %s10, 0
    %p30 = por %p28, %p29
    %p31 = scmp.ne.s32.totalorder %s20, %s23
    %p32 = scmp.eq.s32.totalorder %s15, 1
    %p33 = por %p31, %p32
    %p34 = scmp.ne.s32.totalorder %s23, %s24
    %p35 = scmp.eq.s32.totalorder %s15, 0
    %p36 = por %p34, %p35
    %p37 = scmp.ne.s32.totalorder %s23, %s24
    %p38 = scmp.eq.s32.totalorder %s16, 1
    %p39 = por %p37, %p38
    %p41 = scmp.ne.s32.totalorder %s24, %s40
    %p42 = scmp.eq.s32.totalorder %s16, 0
    %p43 = por %p41, %p42
    %s45 = sadd.s32 %s44, 1
    %p48 = scmp.eq.s32.totalorder %s10, 1
    %p49 = scmp.ne.s32.totalorder %s44, %s46
    %p50 = scmp.eq.s32.totalorder %s10, 0
    %p51 = por %p49, %p50
    %p52 = scmp.ne.s32.totalorder %s44, %s46
    %p53 = scmp.eq.s32.totalorder %s15, 1
    %p54 = por %p52, %p53
    %p55 = scmp.ne.s32.totalorder %s46, %s47
    %p56 = scmp.eq.s32.totalorder %s15, 0
    %p57 = por %p55, %p56
    %p58 = scmp.ne.s32.totalorder %s46, %s47
    %p59 = scmp.eq.s32.totalorder %s16, 1
    %p60 = por %p58, %p59
    %p62 = scmp.ne.s32.totalorder %s47, %s61
    %p63 = scmp.eq.s32.totalorder %s16, 0
    %p64 = por %p62, %p63
    %s66 = sadd.s32 %s65, 1
    %p69 = scmp.eq.s32.totalorder %s10, 1
    %p70 = scmp.ne.s32.totalorder %s65, %s67
    %p71 = scmp.eq.s32.totalorder %s10, 0
    %p72 = por %p70, %p71
    %p73 = scmp.ne.s32.totalorder %s65, %s67
    %p74 = scmp.eq.s32.totalorder %s15, 1
    %p75 = por %p73, %p74
    %p76 = scmp.ne.s32.totalorder %s67, %s68
    %p77 = scmp.eq.s32.totalorder %s15, 0
    %p78 = por %p76, %p77
    %p79 = scmp.ne.s32.totalorder %s67, %s68
    %p80 = scmp.eq.s32.totalorder %s16, 1
    %p81 = por %p79, %p80
    %p83 = scmp.ne.s32.totalorder %s68, %s82
    %p84 = scmp.eq.s32.totalorder %s16, 0
    %p85 = por %p83, %p84
    %s87 = sadd.s32 %s86, 1
    %p90 = scmp.eq.s32.totalorder %s10, 1
    %p91 = scmp.ne.s32.totalorder %s86, %s88
    %p92 = scmp.eq.s32.totalorder %s10, 0
    %p93 = por %p91, %p92
    %p94 = scmp.ne.s32.totalorder %s86, %s88
    %p95 = scmp.eq.s32.totalorder %s15, 1
    %p96 = por %p94, %p95
    %p97 = scmp.ne.s32.totalorder %s88, %s89
    %p98 = scmp.eq.s32.totalorder %s15, 0
    %p99 = por %p97, %p98
    %p100 = scmp.ne.s32.totalorder %s88, %s89
    %p101 = scmp.eq.s32.totalorder %s16, 1
    %p102 = por %p100, %p101
    %p104 = scmp.ne.s32.totalorder %s89, %s103
    %p105 = scmp.eq.s32.totalorder %s16, 0
    %p106 = por %p104, %p105
    %s107 = ssub.s32 %s10, %s17
    %p108 = scmp.eq.s32.totalorder %s107, 0
    %s110 = sadd.s32 %s109, 1
    %s111 = scalar_select %p108, %s109, %s110
    %p114 = pneg %p108
    %p115 = scmp.eq.s32.totalorder %s10, 1
    %p116 = por %p114, %p115
    %p117 = scmp.ne.s32.totalorder %s109, %s112
    %p118 = scmp.eq.s32.totalorder %s10, 0
    %p119 = por %p117, %p118
    %p120 = scmp.ne.s32.totalorder %s109, %s112
    %p121 = scmp.eq.s32.totalorder %s15, 1
    %p122 = por %p120, %p121
    %p123 = scmp.ne.s32.totalorder %s112, %s113
    %p124 = scmp.eq.s32.totalorder %s15, 0
    %p125 = por %p123, %p124
    %p126 = scmp.ne.s32.totalorder %s112, %s113
    %p127 = scmp.eq.s32.totalorder %s16, 1
    %p128 = por %p126, %p127
    %p130 = scmp.ne.s32.totalorder %s113, %s129
    %p131 = scmp.eq.s32.totalorder %s16, 0
    %p132 = por %p130, %p131
    %p133 = scmp.le.s32.totalorder 1, %s10
    %p134 = scmp.lt.s32.totalorder %s10, 3
    %p135 = pnand %p133, %p134
    %p136 = pneg %p135
    // Predicated region
    $region9: #{gcn_forward.1} parent=5 // pred_check
      _
    $region10: #{gcn_forward.1} parent=5 // pred_check_branch
      %138 = sbr.rel (%p135) target = $region12
    $region11: #{gcn_forward.1} parent=5 // pred_region
      %s139 = ssub.s32 %s10, 1
      // Predicated region
      $region13: #{gcn_forward.1} parent=11 // pred_check
        %p140 = pneg %p57
      $region14: #{gcn_forward.1} parent=11 // pred_check_branch
        %142 = sbr.rel (%p140) target = $region16
      $region15: #{gcn_forward.1} parent=11 // pred_region
        _
      $region16: #{gcn_forward.1} parent=11 // pred_fallthru
        _
      // Predicated region
      $region17: #{gcn_forward.1} parent=11 // pred_check
        %p143 = pneg %p78
      $region18: #{gcn_forward.1} parent=11 // pred_check_branch
        %145 = sbr.rel (%p143) target = $region20
      $region19: #{gcn_forward.1} parent=11 // pred_region
        _
      $region20: #{gcn_forward.1} parent=11 // pred_fallthru
        _
      // Predicated region
      $region21: #{gcn_forward.1} parent=11 // pred_check
        %p146 = pneg %p99
      $region22: #{gcn_forward.1} parent=11 // pred_check_branch
        %148 = sbr.rel (%p146) target = $region24
      $region23: #{gcn_forward.1} parent=11 // pred_region
        _
      $region24: #{gcn_forward.1} parent=11 // pred_fallthru
        _
    $region12: #{gcn_forward.1} parent=5 // pred_fallthru
      _
    %p149 = scmp.lt.s32.totalorder %s10, 2
    // Predicated region
    $region25: #{gcn_forward.1} parent=5 // pred_check
      %p150 = pneg %p149
    $region26: #{gcn_forward.1} parent=5 // pred_check_branch
      %152 = sbr.rel (%p150) target = $region28
    $region27: #{gcn_forward.1} parent=5 // pred_region
      // Predicated region
      $region29: #{gcn_forward.1} parent=27 // pred_check
        %p153 = pneg %p30
      $region30: #{gcn_forward.1} parent=27 // pred_check_branch
        %155 = sbr.rel (%p153) target = $region32
      $region31: #{gcn_forward.1} parent=27 // pred_region
        %p156 = scmp.lt.s32.totalorder %s10, 1
        %s157 = scalar_select %p156, %s10, 1
        %s158 = smul.addr %s157, 16
        %s159 = smul.addr %s158, 4
        %s160 = scalar_lea.vmem %s0, %s159
      $region32: #{gcn_forward.1} parent=27 // pred_fallthru
        _
    $region28: #{gcn_forward.1} parent=5 // pred_fallthru
      _
    %p161 = scmp.le.s32.totalorder 1, %s10
    %p162 = scmp.lt.s32.totalorder %s10, 3
    %p163 = pnand %p161, %p162
    %p164 = pneg %p163
    // Predicated region
    $region33: #{gcn_forward.1} parent=5 // pred_check
      _
    $region34: #{gcn_forward.1} parent=5 // pred_check_branch
      %166 = sbr.rel (%p163) target = $region36
    $region35: #{gcn_forward.1} parent=5 // pred_region
      %s167 = ssub.s32 %s10, 1
      %p168 = scmp.lt.s32.totalorder %s15, 1
      %s169 = scalar_select %p168, %s15, 1
      %s170 = smul.addr %s169, 16
      %s171 = smul.addr %s170, 4
      %s172 = scalar_lea.vmem %s0, %s171
      %p173 = pneg %p36
      %p174 = pneg %p33
      %p175 = pneg %p57
      %p176 = pneg %p54
      %p177 = pneg %p78
      %p178 = pneg %p75
      %p179 = pneg %p99
      %p180 = pneg %p96
      %p181 = pneg %p125
      %p182 = pneg %p122
      %p183 = scmp.lt.s32.totalorder %s15, 1
      %s184 = scalar_select %p183, %s15, 1
      %s185 = smul.addr %s184, 16
      %s186 = smul.addr %s185, 8
      %s187 = scalar_lea.vmem %s4, %s186
      %p188 = scmp.lt.s32.totalorder %s15, 1
      %s189 = scalar_select %p188, %s15, 1
      %s190 = smul.addr %s189, 16
      %s191 = smul.addr %s190, 4
      %s192 = scalar_lea.vmem %s0, %s191
      %p193 = scmp.lt.s32.totalorder %s15, 1
      %s194 = scalar_select %p193, %s15, 1
      %s195 = smul.addr %s194, 16
      %s196 = smul.addr %s195, 8
      %s197 = scalar_lea.vmem %s4, %s196
      %v199 = vld [vmem:[%s192] sm:$0xf]
      %v200 = vld [vmem:[%s192 + $0x4] sm:$0xf]
      %v201 = vld [vmem:[%s192 + $0x8] sm:$0xf]
      %v202 = vld [vmem:[%s192 + $0xc] sm:$0xf]
      %v203 = vld [vmem:[%s192 + $0x10] sm:$0xf]
      %v204 = vld [vmem:[%s192 + $0x14] sm:$0xf]
      %v205 = vld [vmem:[%s192 + $0x18] sm:$0xf]
      %v206 = vld [vmem:[%s192 + $0x1c] sm:$0xf]
      %v207 = vld [vmem:[%s192 + $0x20] sm:$0xf]
      %v208 = vld [vmem:[%s192 + $0x24] sm:$0xf]
      %v209 = vld [vmem:[%s192 + $0x28] sm:$0xf]
      %v210 = vld [vmem:[%s192 + $0x2c] sm:$0xf]
      %v211 = vld [vmem:[%s192 + $0x30] sm:$0xf]
      %v212 = vld [vmem:[%s192 + $0x34] sm:$0xf]
      %v213 = vld [vmem:[%s192 + $0x38] sm:$0xf]
      %v214 = vld [vmem:[%s192 + $0x3c] sm:$0xf]
      %v215 = vld [vmem:[%s1] sm:$0xf]
      %v216 = vld [vmem:[%s1 + $0x4] sm:$0xf]
      %v217 = vld [vmem:[%s1 + $0x8] sm:$0xf]
      %v218 = vld [vmem:[%s1 + $0xc] sm:$0xf]
      %v219 = vld [vmem:[%s1 + $0x10] sm:$0xf]
      %v220 = vld [vmem:[%s1 + $0x14] sm:$0xf]
      %v221 = vld [vmem:[%s1 + $0x18] sm:$0xf]
      %v222 = vld [vmem:[%s1 + $0x1c] sm:$0xf]
      %v223 = vld [vmem:[%s1 + $0x20] sm:$0xf]
      %v224 = vld [vmem:[%s1 + $0x24] sm:$0xf]
      %v225 = vld [vmem:[%s1 + $0x28] sm:$0xf]
      %v226 = vld [vmem:[%s1 + $0x2c] sm:$0xf]
      %v227 = vld [vmem:[%s1 + $0x30] sm:$0xf]
      %v228 = vld [vmem:[%s1 + $0x34] sm:$0xf]
      %v229 = vld [vmem:[%s1 + $0x38] sm:$0xf]
      %v230 = vld [vmem:[%s1 + $0x3c] sm:$0xf]
      %v231 = vld [vmem:[%s2] sm:$0x1]
      %v233 = vlaneseq
      %v234 = vshrl.u32 %v233, 7
      %v235 = vsub.s32 0, %v234
      %v236 = vrot.slane %v231, %v235
      %v254 = vunpack.c.l.b16 %v199
      %v255 = vunpack.c.l.b16 %v200
      %v256 = vunpack.c.l.b16 %v201
      %v257 = vunpack.c.l.b16 %v202
      %v258 = vunpack.c.l.b16 %v203
      %v259 = vunpack.c.l.b16 %v204
      %v260 = vunpack.c.l.b16 %v205
      %v261 = vunpack.c.l.b16 %v206
      %v262 = vunpack.c.l.b16 %v207
      %v263 = vunpack.c.l.b16 %v208
      %v264 = vunpack.c.l.b16 %v209
      %v265 = vunpack.c.l.b16 %v210
      %v266 = vunpack.c.l.b16 %v211
      %v267 = vunpack.c.l.b16 %v212
      %v268 = vunpack.c.l.b16 %v213
      %v269 = vunpack.c.l.b16 %v214
      %v270 = vpack.c.b16 %v255, %v254
      %v271 = vpack.c.b16 %v257, %v256
      %v272 = vpack.c.b16 %v259, %v258
      %v273 = vpack.c.b16 %v261, %v260
      %v274 = vpack.c.b16 %v263, %v262
      %v275 = vpack.c.b16 %v265, %v264
      %v276 = vpack.c.b16 %v267, %v266
      %v277 = vpack.c.b16 %v269, %v268
      %v302 = vunpack.c.l.b16 %v215
      %v303 = vunpack.c.l.b16 %v216
      %v304 = vunpack.c.l.b16 %v217
      %v305 = vunpack.c.l.b16 %v218
      %v306 = vunpack.c.l.b16 %v219
      %v307 = vunpack.c.l.b16 %v220
      %v308 = vunpack.c.l.b16 %v221
      %v309 = vunpack.c.l.b16 %v222
      %v310 = vunpack.c.l.b16 %v223
      %v311 = vunpack.c.l.b16 %v224
      %v312 = vunpack.c.l.b16 %v225
      %v313 = vunpack.c.l.b16 %v226
      %v314 = vunpack.c.l.b16 %v227
      %v315 = vunpack.c.l.b16 %v228
      %v316 = vunpack.c.l.b16 %v229
      %v317 = vunpack.c.l.b16 %v230
      %v318 = vpack.c.b16 %v303, %v302
      %v319 = vpack.c.b16 %v305, %v304
      %v320 = vpack.c.b16 %v307, %v306
      %v321 = vpack.c.b16 %v309, %v308
      %v322 = vpack.c.b16 %v311, %v310
      %v323 = vpack.c.b16 %v313, %v312
      %v324 = vpack.c.b16 %v315, %v314
      %v325 = vpack.c.b16 %v317, %v316
      %334 = vmatprep.subr.bf16.mxu0 0
      %335 = vmatpush1.bf16.msra.mxu0 %v318
      %336 = vmatprep.subr.bf16.mxu0 0
      %337 = vmatpush1.bf16.msra.mxu0 %v319
      %338 = vmatprep.subr.bf16.mxu0 0
      %339 = vmatpush1.bf16.msra.mxu0 %v320
      %340 = vmatprep.subr.bf16.mxu0 0
      %341 = vmatpush1.bf16.msra.mxu0 %v321
      %342 = vmatprep.subr.bf16.mxu0 0
      %343 = vmatpush1.bf16.msra.mxu0 %v322
      %344 = vmatprep.subr.bf16.mxu0 0
      %345 = vmatpush1.bf16.msra.mxu0 %v323
      %346 = vmatprep.subr.bf16.mxu0 0
      %347 = vmatpush1.bf16.msra.mxu0 %v324
      %348 = vmatprep.subr.bf16.mxu0 0
      %349 = vmatpush1.bf16.msra.mxu0 %v325
      %350 = vmatprep.subr.bf16.mxu0 0
      %351 = vmatpush1.bf16.msra.mxu0 0
      %352 = vmatprep.subr.bf16.mxu0 0
      %353 = vmatpush1.bf16.msra.mxu0 0
      %354 = vmatprep.subr.bf16.mxu0 0
      %355 = vmatpush1.bf16.msra.mxu0 0
      %356 = vmatprep.subr.bf16.mxu0 0
      %357 = vmatpush1.bf16.msra.mxu0 0
      %358 = vmatprep.subr.bf16.mxu0 0
      %359 = vmatpush1.bf16.msra.mxu0 0
      %360 = vmatprep.subr.bf16.mxu0 0
      %361 = vmatpush1.bf16.msra.mxu0 0
      %362 = vmatprep.subr.bf16.mxu0 0
      %363 = vmatpush1.bf16.msra.mxu0 0
      %364 = vmatprep.subr.bf16.mxu0 0
      %365 = vmatpush1.bf16.msra.mxu0 0
      %366 = vmatprep.mubr.bf16.mxu0 0
      %367 = vmatmul.mubr.bf16.gmra.mrb[0].mxu0 %v270
      %v368 = vpop.f32.mrb[0].mxu0
      %v369 = vadd.f32 %v236, %v368
      %v370 = vpop.f32.mrb[0].mxu0
      %v371 = vpop.f32.mrb[0].mxu0
      %v372 = vadd.f32 %v236, %v371
      %v373 = vpop.f32.mrb[0].mxu0
      %374 = vmatprep.mubr.bf16.mxu0 0
      %375 = vmatmul.mubr.bf16.gmra.mrb[0].mxu0 %v271
      %v376 = vpop.f32.mrb[0].mxu0
      %v377 = vadd.f32 %v236, %v376
      %v378 = vpop.f32.mrb[0].mxu0
      %v379 = vpop.f32.mrb[0].mxu0
      %v380 = vadd.f32 %v236, %v379
      %v381 = vpop.f32.mrb[0].mxu0
      %382 = vmatprep.mubr.bf16.mxu0 0
      %383 = vmatmul.mubr.bf16.gmra.mrb[0].mxu0 %v272
      %v384 = vpop.f32.mrb[0].mxu0
      %v385 = vadd.f32 %v236, %v384
      %v386 = vpop.f32.mrb[0].mxu0
      %v387 = vpop.f32.mrb[0].mxu0
      %v388 = vadd.f32 %v236, %v387
      %v389 = vpop.f32.mrb[0].mxu0
      %390 = vmatprep.mubr.bf16.mxu0 0
      %391 = vmatmul.mubr.bf16.gmra.mrb[0].mxu0 %v273
      %v392 = vpop.f32.mrb[0].mxu0
      %v393 = vadd.f32 %v236, %v392
      %v394 = vpop.f32.mrb[0].mxu0
      %v395 = vpop.f32.mrb[0].mxu0
      %v396 = vadd.f32 %v236, %v395
      %v397 = vpop.f32.mrb[0].mxu0
      %398 = vmatprep.mubr.bf16.mxu0 0
      %399 = vmatmul.mubr.bf16.gmra.mrb[0].mxu0 %v274
      %v400 = vpop.f32.mrb[0].mxu0
      %v401 = vadd.f32 %v236, %v400
      %v402 = vpop.f32.mrb[0].mxu0
      %v403 = vpop.f32.mrb[0].mxu0
      %v404 = vadd.f32 %v236, %v403
      %v405 = vpop.f32.mrb[0].mxu0
      %406 = vmatprep.mubr.bf16.mxu0 0
      %407 = vmatmul.mubr.bf16.gmra.mrb[0].mxu0 %v275
      %v408 = vpop.f32.mrb[0].mxu0
      %v409 = vadd.f32 %v236, %v408
      %v410 = vpop.f32.mrb[0].mxu0
      %v411 = vpop.f32.mrb[0].mxu0
      %v412 = vadd.f32 %v236, %v411
      %v413 = vpop.f32.mrb[0].mxu0
      %414 = vmatprep.mubr.bf16.mxu0 0
      %415 = vmatmul.mubr.bf16.gmra.mrb[0].mxu0 %v276
      %v416 = vpop.f32.mrb[0].mxu0
      %v417 = vadd.f32 %v236, %v416
      %v418 = vpop.f32.mrb[0].mxu0
      %v419 = vpop.f32.mrb[0].mxu0
      %v420 = vadd.f32 %v236, %v419
      %v421 = vpop.f32.mrb[0].mxu0
      %422 = vmatprep.mubr.bf16.mxu0 0
      %423 = vmatmul.mubr.bf16.gmra.mrb[0].mxu0 %v277
      %v424 = vpop.f32.mrb[0].mxu0
      %v425 = vadd.f32 %v236, %v424
      %v426 = vpop.f32.mrb[0].mxu0
      %v427 = vpop.f32.mrb[0].mxu0
      %v428 = vadd.f32 %v236, %v427
      %v429 = vpop.f32.mrb[0].mxu0
      %430 = vdwg.mxu0
      %v431 = vmax.f32 %v369, 0.0
      %v432 = vmax.f32 %v372, 0.0
      %v433 = vmax.f32 %v377, 0.0
      %v434 = vmax.f32 %v380, 0.0
      %v435 = vmax.f32 %v385, 0.0
      %v436 = vmax.f32 %v388, 0.0
      %v437 = vmax.f32 %v393, 0.0
      %v438 = vmax.f32 %v396, 0.0
      %v439 = vmax.f32 %v401, 0.0
      %v440 = vmax.f32 %v404, 0.0
      %v441 = vmax.f32 %v409, 0.0
      %v442 = vmax.f32 %v412, 0.0
      %v443 = vmax.f32 %v417, 0.0
      %v444 = vmax.f32 %v420, 0.0
      %v445 = vmax.f32 %v425, 0.0
      %v446 = vmax.f32 %v428, 0.0
      %v447 = vld [vmem:[%s3] sm:$0xf]
      %v448 = vld [vmem:[%s3 + $0x4] sm:$0xf]
      %v449 = vld [vmem:[%s3 + $0x8] sm:$0xf]
      %v450 = vld [vmem:[%s3 + $0xc] sm:$0xf]
      %v451 = vld [vmem:[%s3 + $0x10] sm:$0xf]
      %v452 = vld [vmem:[%s3 + $0x14] sm:$0xf]
      %v453 = vld [vmem:[%s3 + $0x18] sm:$0xf]
      %v454 = vld [vmem:[%s3 + $0x1c] sm:$0xf]
      %v455 = vld [vmem:[%s3 + $0x20] sm:$0xf]
      %v456 = vld [vmem:[%s3 + $0x24] sm:$0xf]
      %v457 = vld [vmem:[%s3 + $0x28] sm:$0xf]
      %v458 = vld [vmem:[%s3 + $0x2c] sm:$0xf]
      %v459 = vld [vmem:[%s3 + $0x30] sm:$0xf]
      %v460 = vld [vmem:[%s3 + $0x34] sm:$0xf]
      %v461 = vld [vmem:[%s3 + $0x38] sm:$0xf]
      %v462 = vld [vmem:[%s3 + $0x3c] sm:$0xf]
      %v463 = vpack.c.bf16 %v432, %v431
      %v464 = vpack.c.bf16 %v434, %v433
      %v465 = vpack.c.bf16 %v436, %v435
      %v466 = vpack.c.bf16 %v438, %v437
      %v467 = vpack.c.bf16 %v440, %v439
      %v468 = vpack.c.bf16 %v442, %v441
      %v469 = vpack.c.bf16 %v444, %v443
      %v470 = vpack.c.bf16 %v446, %v445
      %v487 = vunpack.c.l.b16 %v447
      %v488 = vunpack.c.l.b16 %v448
      %v489 = vunpack.c.l.b16 %v449
      %v490 = vunpack.c.l.b16 %v450
      %v491 = vunpack.c.l.b16 %v451
      %v492 = vunpack.c.l.b16 %v452
      %v493 = vunpack.c.l.b16 %v453
      %v494 = vunpack.c.l.b16 %v454
      %v495 = vunpack.c.l.b16 %v455
      %v496 = vunpack.c.l.b16 %v456
      %v497 = vunpack.c.l.b16 %v457
      %v498 = vunpack.c.l.b16 %v458
      %v499 = vunpack.c.l.b16 %v459
      %v500 = vunpack.c.l.b16 %v460
      %v501 = vunpack.c.l.b16 %v461
      %v502 = vunpack.c.l.b16 %v462
      %v503 = vpack.c.b16 %v488, %v487
      %v504 = vpack.c.b16 %v490, %v489
      %v505 = vpack.c.b16 %v492, %v491
      %v506 = vpack.c.b16 %v494, %v493
      %v507 = vpack.c.b16 %v496, %v495
      %v508 = vpack.c.b16 %v498, %v497
      %v509 = vpack.c.b16 %v500, %v499
      %v510 = vpack.c.b16 %v502, %v501
      %519 = vmatprep.subr.bf16.mxu0 0
      %520 = vmatpush1.bf16.msra.mxu0 %v463
      %521 = vmatprep.subr.bf16.mxu0 0
      %522 = vmatpush1.bf16.msra.mxu0 %v464
      %523 = vmatprep.subr.bf16.mxu0 0
      %524 = vmatpush1.bf16.msra.mxu0 %v465
      %525 = vmatprep.subr.bf16.mxu0 0
      %526 = vmatpush1.bf16.msra.mxu0 %v466
      %527 = vmatprep.subr.bf16.mxu0 0
      %528 = vmatpush1.bf16.msra.mxu0 %v467
      %529 = vmatprep.subr.bf16.mxu0 0
      %530 = vmatpush1.bf16.msra.mxu0 %v468
      %531 = vmatprep.subr.bf16.mxu0 0
      %532 = vmatpush1.bf16.msra.mxu0 %v469
      %533 = vmatprep.subr.bf16.mxu0 0
      %534 = vmatpush1.bf16.msra.mxu0 %v470
      %535 = vmatprep.subr.bf16.mxu0 0
      %536 = vmatpush1.bf16.msra.mxu0 0
      %537 = vmatprep.subr.bf16.mxu0 0
      %538 = vmatpush1.bf16.msra.mxu0 0
      %539 = vmatprep.subr.bf16.mxu0 0
      %540 = vmatpush1.bf16.msra.mxu0 0
      %541 = vmatprep.subr.bf16.mxu0 0
      %542 = vmatpush1.bf16.msra.mxu0 0
      %543 = vmatprep.subr.bf16.mxu0 0
      %544 = vmatpush1.bf16.msra.mxu0 0
      %545 = vmatprep.subr.bf16.mxu0 0
      %546 = vmatpush1.bf16.msra.mxu0 0
      %547 = vmatprep.subr.bf16.mxu0 0
      %548 = vmatpush1.bf16.msra.mxu0 0
      %549 = vmatprep.subr.bf16.mxu0 0
      %550 = vmatpush1.bf16.msra.mxu0 0
      %551 = vmatprep.mubr.bf16.mxu0 0
      %552 = vmatmul.mubr.bf16.gmra.mrb[0].mxu0 %v503
      %v553 = vpop.f32.mrb[0].mxu0
      %v554 = vadd.f32 0.0, %v553
      %v555 = vpop.f32.mrb[0].mxu0
      %v556 = vpop.f32.mrb[0].mxu0
      %v557 = vadd.f32 0.0, %v556
      %v558 = vpop.f32.mrb[0].mxu0
      %559 = vmatprep.mubr.bf16.mxu0 0
      %560 = vmatmul.mubr.bf16.gmra.mrb[0].mxu0 %v504
      %v561 = vpop.f32.mrb[0].mxu0
      %v562 = vadd.f32 0.0, %v561
      %v563 = vpop.f32.mrb[0].mxu0
      %v564 = vpop.f32.mrb[0].mxu0
      %v565 = vadd.f32 0.0, %v564
      %v566 = vpop.f32.mrb[0].mxu0
      %567 = vmatprep.mubr.bf16.mxu0 0
      %568 = vmatmul.mubr.bf16.gmra.mrb[0].mxu0 %v505
      %v569 = vpop.f32.mrb[0].mxu0
      %v570 = vadd.f32 0.0, %v569
      %v571 = vpop.f32.mrb[0].mxu0
      %v572 = vpop.f32.mrb[0].mxu0
      %v573 = vadd.f32 0.0, %v572
      %v574 = vpop.f32.mrb[0].mxu0
      %575 = vmatprep.mubr.bf16.mxu0 0
      %576 = vmatmul.mubr.bf16.gmra.mrb[0].mxu0 %v506
      %v577 = vpop.f32.mrb[0].mxu0
      %v578 = vadd.f32 0.0, %v577
      %v579 = vpop.f32.mrb[0].mxu0
      %v580 = vpop.f32.mrb[0].mxu0
      %v581 = vadd.f32 0.0, %v580
      %v582 = vpop.f32.mrb[0].mxu0
      %583 = vmatprep.mubr.bf16.mxu0 0
      %584 = vmatmul.mubr.bf16.gmra.mrb[0].mxu0 %v507
      %v585 = vpop.f32.mrb[0].mxu0
      %v586 = vadd.f32 0.0, %v585
      %v587 = vpop.f32.mrb[0].mxu0
      %v588 = vpop.f32.mrb[0].mxu0
      %v589 = vadd.f32 0.0, %v588
      %v590 = vpop.f32.mrb[0].mxu0
      %591 = vmatprep.mubr.bf16.mxu0 0
      %592 = vmatmul.mubr.bf16.gmra.mrb[0].mxu0 %v508
      %v593 = vpop.f32.mrb[0].mxu0
      %v594 = vadd.f32 0.0, %v593
      %v595 = vpop.f32.mrb[0].mxu0
      %v596 = vpop.f32.mrb[0].mxu0
      %v597 = vadd.f32 0.0, %v596
      %v598 = vpop.f32.mrb[0].mxu0
      %599 = vmatprep.mubr.bf16.mxu0 0
      %600 = vmatmul.mubr.bf16.gmra.mrb[0].mxu0 %v509
      %v601 = vpop.f32.mrb[0].mxu0
      %v602 = vadd.f32 0.0, %v601
      %v603 = vpop.f32.mrb[0].mxu0
      %v604 = vpop.f32.mrb[0].mxu0
      %v605 = vadd.f32 0.0, %v604
      %v606 = vpop.f32.mrb[0].mxu0
      %607 = vmatprep.mubr.bf16.mxu0 0
      %608 = vmatmul.mubr.bf16.gmra.mrb[0].mxu0 %v510
      %v609 = vpop.f32.mrb[0].mxu0
      %v610 = vadd.f32 0.0, %v609
      %v611 = vpop.f32.mrb[0].mxu0
      %v612 = vpop.f32.mrb[0].mxu0
      %v613 = vadd.f32 0.0, %v612
      %v614 = vpop.f32.mrb[0].mxu0
      %615 = vdwg.mxu0
      %616 = vst [vmem:[%s197] sm:$0xff] %v554
      %617 = vst [vmem:[%s197 + $0x8] sm:$0xff] %v557
      %618 = vst [vmem:[%s197 + $0x10] sm:$0xff] %v562
      %619 = vst [vmem:[%s197 + $0x18] sm:$0xff] %v565
      %620 = vst [vmem:[%s197 + $0x20] sm:$0xff] %v570
      %621 = vst [vmem:[%s197 + $0x28] sm:$0xff] %v573
      %622 = vst [vmem:[%s197 + $0x30] sm:$0xff] %v578
      %623 = vst [vmem:[%s197 + $0x38] sm:$0xff] %v581
      %624 = vst [vmem:[%s197 + $0x40] sm:$0xff] %v586
      %625 = vst [vmem:[%s197 + $0x48] sm:$0xff] %v589
      %626 = vst [vmem:[%s197 + $0x50] sm:$0xff] %v594
      %627 = vst [vmem:[%s197 + $0x58] sm:$0xff] %v597
      %628 = vst [vmem:[%s197 + $0x60] sm:$0xff] %v602
      %629 = vst [vmem:[%s197 + $0x68] sm:$0xff] %v605
      %630 = vst [vmem:[%s197 + $0x70] sm:$0xff] %v610
      %631 = vst [vmem:[%s197 + $0x78] sm:$0xff] %v613
      %p632 = scmp.lt.s32.totalorder %s15, 1
      %s633 = scalar_select %p632, %s15, 1
      %s634 = smul.addr %s633, 16
      %s635 = smul.addr %s634, 8
      %s636 = scalar_lea.vmem %s4, %s635
      // Predicated region
      $region37: #{gcn_forward.1} parent=35 // pred_check
        %p637 = pneg %p122
      $region38: #{gcn_forward.1} parent=35 // pred_check_branch
        %639 = sbr.rel (%p637) target = $region40
      $region39: #{gcn_forward.1} parent=35 // pred_region
        _
      $region40: #{gcn_forward.1} parent=35 // pred_fallthru
        _
    $region36: #{gcn_forward.1} parent=5 // pred_fallthru
      _
    %p640 = scmp.le.s32.totalorder 2, %s10
    // Predicated region
    $region41: #{gcn_forward.1} parent=5 // pred_check
      %p641 = pneg %p640
    $region42: #{gcn_forward.1} parent=5 // pred_check_branch
      %643 = sbr.rel (%p641) target = $region44
    $region43: #{gcn_forward.1} parent=5 // pred_region
      %s644 = ssub.s32 %s10, 2
      // Predicated region
      $region45: #{gcn_forward.1} parent=43 // pred_check
        %p645 = pneg %p128
      $region46: #{gcn_forward.1} parent=43 // pred_check_branch
        %647 = sbr.rel (%p645) target = $region48
      $region47: #{gcn_forward.1} parent=43 // pred_region
        %p648 = scmp.lt.s32.totalorder %s16, 1
        %s649 = scalar_select %p648, %s16, 1
        %s650 = smul.addr %s649, 16
        %s651 = smul.addr %s650, 8
        %s652 = scalar_lea.vmem %s4, %s651
      $region48: #{gcn_forward.1} parent=43 // pred_fallthru
        _
    $region44: #{gcn_forward.1} parent=5 // pred_fallthru
      _
  $region6: #{gcn_forward.1} parent=0 // loop_footer
    %s14 = sadd.s32 1, %s10
  $region7: #{gcn_forward.1} parent=0 // loop_footer_branch
    %9 = sbr.rel target = $region3
  $region8: #{gcn_forward.1} parent=0 // loop_exit
    _

</llo_original>
